<compile_context>
chip_gen: v5e
topology: v5e:2x2
jax: 0.10.0
libtpu: 0.0.40
codegen_flags: <defaults>
</compile_context>

<pallas_src>
import functools

import jax
import jax.numpy as jnp
from jax.experimental import pallas as pl
from jax.experimental.pallas import tpu as pltpu


def _channel_shuffle_kernel(x_ref, o_ref, *, groups):
    # x_ref: (groups, cj, hw_blk)  -- x_ref[i, j] is input channel i*cpg + (j0 + j)
    # o_ref: (cj*groups, hw_blk)   -- row j*groups + i is output channel (j0 + j)*groups + i
    #
    # One copy per j: dense contiguous store of `groups` sublanes (1 vst slot),
    # sublane-gathered load of the `groups` inputs (3 vld slots). Static slices
    # only — plain vld/vst, no XLU transpose, no relayout.
    cj = x_ref.shape[1]
    for j in range(cj):                       # static unroll over the cpg chunk
        o_ref[j * groups:(j + 1) * groups, :] = x_ref[:, j, :]


def channel_shuffle(x, groups):
    """ChannelShuffle forward for NCHW input, matching the PyTorch module."""
    N, C, H, W = x.shape
    assert C % groups == 0, "channels must be divisible by groups"
    cpg = C // groups
    if groups == 1 or cpg == 1:
        return x                               # permutation is the identity

    HW = H * W
    itemsize = jnp.dtype(x.dtype).itemsize

    # --- generation-aware VMEM budget: big slabs on v5e/v6e, capped on v7x. ---
    try:
        vmem_cap = int(pltpu.get_tpu_info().vmem_capacity_bytes)
    except Exception:
        vmem_cap = 64 * 1024 * 1024            # unknown -> assume v7x-sized VMEM
    if vmem_cap >= 96 * 1024 * 1024:           # v5e / v6e: 128 MiB physical VMEM
        vmem_budget = 64 * 1024 * 1024
        vmem_limit = 80 * 1024 * 1024          # headroom for compiler scratch
    else:                                      # v7x: 64 MiB physical / 32 MiB scoped
        vmem_budget = 24 * 1024 * 1024
        vmem_limit = 32 * 1024 * 1024

    def step_bytes(c_blk, hw_blk):             # in + out, double-buffered
        return 4 * c_blk * hw_blk * itemsize

    # --- spatial (lane) tiling: lane-dense, 128-multiple slabs. ---
    if HW <= 128:
        hw_blk = HW                            # full-dim block (only option)
    elif HW % 128 == 0 and step_bytes(C, HW) <= vmem_budget:
        hw_blk = HW                            # one full, lane-dense slab
    else:
        # Largest 128-multiple that fits with full C; if HW is not a multiple of
        # 128 only the final slab is lane-masked.
        lanes = (vmem_budget // (4 * C * itemsize)) // 128 * 128
        hw_blk = int(min(max(lanes, 128), (HW // 128) * 128))

    # --- channel-split fallback: if even a 128-lane slab overruns the budget,
    #     chunk the cpg (j) axis in multiples of 8 sublanes; the permutation
    #     stays block-local and both blocks stay (8,128)-compliant. ---
    cj_blk = cpg
    if step_bytes(C, hw_blk) > vmem_budget and cpg > 8:
        max_cj = vmem_budget // (4 * groups * hw_blk * itemsize)
        cj_blk = max(8, int(max_cj) // 8 * 8)
        cj_blk = min(cj_blk, cpg)
        while cpg % cj_blk != 0 and cj_blk > 8:
            cj_blk -= 8
        if cpg % cj_blk != 0:
            cj_blk = cpg                       # give up splitting; rely on vmem_limit

    n_hw = pl.cdiv(HW, hw_blk)
    n_cj = cpg // cj_blk

    # --- v7x has 2 TensorCores sharing HBM: make sure the all-parallel grid has
    #     at least 2 steps so both cores get work (harmless on 1-TC chips). ---
    if N * n_cj * n_hw < 2 and hw_blk >= 256:
        hw_blk = ((hw_blk // 2 + 127) // 128) * 128
        n_hw = pl.cdiv(HW, hw_blk)

    x4 = x.reshape(N, groups, cpg, HW)         # free view of the NCHW layout
    c_out_blk = cj_blk * groups

    kernel = functools.partial(_channel_shuffle_kernel, groups=groups)

    out3 = pl.pallas_call(
        kernel,
        out_shape=jax.ShapeDtypeStruct((N, C, HW), x.dtype),
        grid=(N, n_cj, n_hw),
        in_specs=[
            pl.BlockSpec((None, groups, cj_blk, hw_blk),
                         lambda n, jc, s: (n, 0, jc, s)),
        ],
        out_specs=pl.BlockSpec((None, c_out_blk, hw_blk),
                               lambda n, jc, s: (n, jc, s)),
        compiler_params=pltpu.CompilerParams(
            dimension_semantics=("parallel", "parallel", "parallel"),
            vmem_limit_bytes=vmem_limit,
        ),
    )(x4)

    return out3.reshape(N, C, H, W)


def _reference(x, groups):
    N, C, H, W = x.shape
    cpg = C // groups
    y = x.reshape(N, groups, cpg, H, W)
    y = jnp.transpose(y, (0, 2, 1, 3, 4))
    return y.reshape(N, C, H, W)


if __name__ == "__main__":
    key = jax.random.PRNGKey(0)

    N, C, H, W = 2, 4, 16, 16
    groups = 2

    x = jax.random.normal(key, (N, C, H, W), dtype=jnp.float32)

    out = channel_shuffle(x, groups)
    out = jax.block_until_ready(out)

    ref = _reference(x, groups)
    assert out.shape == (N, C, H, W)
    assert jnp.array_equal(out, ref), "channel shuffle mismatch"

    print("KERNEL_OK")
</pallas_src>

<mosaic_0001>
module attributes {stable_mosaic.version = 11 : i64} {
  func.func @_channel_shuffle_kernel(%arg0: i32, %arg1: i32, %arg2: i32, %arg3: memref<1x2x2x256xf32, #tpu.memory_space<vmem>>, %arg4: memref<1x4x256xf32, #tpu.memory_space<vmem>>) attributes {dimension_semantics = [#tpu.dimension_semantics<parallel>, #tpu.dimension_semantics<parallel>, #tpu.dimension_semantics<parallel>], iteration_bounds = array<i64: 2, 1, 1>, scalar_prefetch = 0 : i64, scratch_operands = 0 : i64, tpu.core_type = #tpu.core_type<tc>, window_params = [{transform_indices = @transform_0, window_bounds = array<i64: 1, 2, 2, 256>}, {transform_indices = @transform_1, window_bounds = array<i64: 1, 4, 256>}]} {
    %c0 = arith.constant 0 : index
    %c0_0 = arith.constant 0 : index
    %c0_1 = arith.constant 0 : index
    %c0_2 = arith.constant 0 : index
    %0 = vector.load %arg3[%c0, %c0_0, %c0_1, %c0_2] : memref<1x2x2x256xf32, #tpu.memory_space<vmem>>, vector<1x2x1x256xf32>
    %1 = vector.shape_cast %0 : vector<1x2x1x256xf32> to vector<2x256xf32>
    %c0_3 = arith.constant 0 : index
    %c0_4 = arith.constant 0 : index
    %c0_5 = arith.constant 0 : index
    %2 = vector.load %arg4[%c0_3, %c0_4, %c0_5] : memref<1x4x256xf32, #tpu.memory_space<vmem>>, vector<1x2x256xf32>
    %3 = vector.shape_cast %2 : vector<1x2x256xf32> to vector<2x256xf32>
    %4 = vector.shape_cast %1 : vector<2x256xf32> to vector<1x2x256xf32>
    tpu.vector_store %arg4[%c0_3, %c0_4, %c0_5], %4 {strides = array<i32>} : memref<1x4x256xf32, #tpu.memory_space<vmem>>, vector<1x2x256xf32>,
    %c0_6 = arith.constant 0 : index
    %c0_7 = arith.constant 0 : index
    %c1 = arith.constant 1 : index
    %c0_8 = arith.constant 0 : index
    %5 = vector.load %arg3[%c0_6, %c0_7, %c1, %c0_8] : memref<1x2x2x256xf32, #tpu.memory_space<vmem>>, vector<1x2x1x256xf32>
    %6 = vector.shape_cast %5 : vector<1x2x1x256xf32> to vector<2x256xf32>
    %c0_9 = arith.constant 0 : index
    %c2 = arith.constant 2 : index
    %c0_10 = arith.constant 0 : index
    %7 = vector.load %arg4[%c0_9, %c2, %c0_10] : memref<1x4x256xf32, #tpu.memory_space<vmem>>, vector<1x2x256xf32>
    %8 = vector.shape_cast %7 : vector<1x2x256xf32> to vector<2x256xf32>
    %9 = vector.shape_cast %6 : vector<2x256xf32> to vector<1x2x256xf32>
    tpu.vector_store %arg4[%c0_9, %c2, %c0_10], %9 {strides = array<i32>} : memref<1x4x256xf32, #tpu.memory_space<vmem>>, vector<1x2x256xf32>,
    return
  }
  func.func @transform_0(%arg0: i32, %arg1: i32, %arg2: i32) -> (i32, i32, i32, i32) {
    %c0_i32 = arith.constant 0 : i32
    %c0_i32_0 = arith.constant 0 : i32
    return %arg0, %c0_i32, %arg1, %arg2 : i32, i32, i32, i32
  }
  func.func @transform_1(%arg0: i32, %arg1: i32, %arg2: i32) -> (i32, i32, i32) {
    %c0_i32 = arith.constant 0 : i32
    return %arg0, %arg1, %arg2 : i32, i32, i32
  }
}

</mosaic_0001>

<llo_original>
// kernel: tpu_custom_call.1
$region0: #{tpu_custom_call.1}
  #allocation0 [shape = 'u32[]', space=smem, size = 0x4, offset = 0x4, fixed_abs, tag = 'smem constant byte address 0x4 - core index']
  #allocation1 [shape = 'u32[72,128]{1,0:T(1,128)}', space=vmem, size = 0x9000, scoped, tag = 'internal scratch']
  %s0 = inlined_call_operand.hbm [shape: f32[2,2,2,256], index: 0, kind: input, shape index: {}]
  %s1 = inlined_call_operand.hbm [shape: f32[2,4,256], index: 1, kind: output, shape index: {}]
  %s2 = sld [smem:[#allocation0]]
  $region41: #{tpu_custom_call.1} parent=0
    _
  %s4 = ssub.s32 1, %s2
  %s5 = scalar_select 0, %s4, %s2
  $region1: #{tpu_custom_call.1} parent=0
    #allocation2 [shape = 'u8[8192]{0}', space=vmem, size = 0x2000, scoped, tag = 'input window, operand 0']
    #allocation3 [shape = 's32[2]{0}', space=sflag, size = 0x8, scoped, tag = 'scoped memory for tpu_custom_call.1']
    #allocation4 [shape = 's32[2]{0}', space=sflag, size = 0x8, scoped, tag = 'scoped memory for tpu_custom_call.1']
    #allocation5 [shape = 'u8[8192]{0}', space=vmem, size = 0x2000, scoped, tag = 'output window, operand 0']
    %6 = vsyncpa [#allocation3], 0
    %s7 = scalar_lea.sflag [#allocation3], 1
    %8 = vsyncpa %s7, 0
    %9 = vsyncpa [#allocation4], 0
    %s10 = scalar_lea.sflag [#allocation4], 1
    %11 = vsyncpa %s10, 0
    loop: start=0, step=1, limit=4
    $region2: #{tpu_custom_call.1} parent=1 // loop_pre_header
      _
    $region3: #{tpu_custom_call.1} parent=1 // loop_header
      %s13 = sphi 0, %s17
      %p14 = scmp.ge.s32.totalorder %s13, 4
      %s20 = sphi 0, %s39
      %s21 = sphi 0, %s35
      %s22 = sphi 0, %s31
      %s23 = sphi 0, %s20
      %s24 = sphi 0, %s21
      %s25 = sphi 0, %s22
      %s26 = sphi 0, %s23
      %s27 = sphi 0, %s24
      %s28 = sphi 0, %s25
      %s46 = sphi 0, %s48
      %s49 = sphi 0, %s46
      %s50 = sphi 0, %s49
      %s66 = sphi 0, %s50
      %s76 = sphi 0, %s78
      %s79 = sphi 0, %s76
      %s80 = sphi 0, %s79
      %s96 = sphi 0, %s80
    $region4: #{tpu_custom_call.1} parent=1 // loop_header_branch
      %16 = sbr.rel (%p14) target = $region8
    $region5: #{tpu_custom_call.1} parent=1 // loop_body
      %s18 = ssub.s32 %s13, 1
      %s19 = ssub.s32 %s13, 2
      %s29 = sadd.s32 1, %s22
      %p30 = scmp.ge.s32.totalorder %s29, 1
      %s31 = scalar_select %p30, 0, %s29
      %s32 = sadd.s32 1, %s21
      %s33 = scalar_select %p30, %s32, %s21
      %p34 = scmp.ge.s32.totalorder %s33, 1
      %s35 = scalar_select %p34, 0, %s33
      %s36 = sadd.s32 1, %s20
      %s37 = scalar_select %p34, %s36, %s20
      %p38 = scmp.ge.s32.totalorder %s37, 2
      %s39 = scalar_select %p38, 0, %s37
      %s40 = ssub.s32 %s20, %s39
      %s41 = ssub.s32 %s21, %s35
      %s42 = sor.u32 %s40, %s41
      %s43 = ssub.s32 %s22, %s31
      %s44 = sor.u32 %s42, %s43
      %p45 = scmp.eq.s32.totalorder %s44, 0
      %s47 = sadd.s32 %s46, 1
      %s48 = scalar_select %p45, %s46, %s47
      %p51 = pneg %p45
      %p52 = scmp.eq.s32.totalorder %s13, 1
      %p53 = por %p51, %p52
      %p54 = scmp.ne.s32.totalorder %s46, %s49
      %p55 = scmp.eq.s32.totalorder %s13, 0
      %p56 = por %p54, %p55
      %p57 = scmp.ne.s32.totalorder %s46, %s49
      %p58 = scmp.eq.s32.totalorder %s18, 1
      %p59 = por %p57, %p58
      %p60 = scmp.ne.s32.totalorder %s49, %s50
      %p61 = scmp.eq.s32.totalorder %s18, 0
      %p62 = por %p60, %p61
      %p63 = scmp.ne.s32.totalorder %s49, %s50
      %p64 = scmp.eq.s32.totalorder %s19, 1
      %p65 = por %p63, %p64
      %p67 = scmp.ne.s32.totalorder %s50, %s66
      %p68 = scmp.eq.s32.totalorder %s19, 0
      %p69 = por %p67, %p68
      %s70 = ssub.s32 %s20, %s39
      %s71 = ssub.s32 %s21, %s35
      %s72 = sor.u32 %s70, %s71
      %s73 = ssub.s32 %s22, %s31
      %s74 = sor.u32 %s72, %s73
      %p75 = scmp.eq.s32.totalorder %s74, 0
      %s77 = sadd.s32 %s76, 1
      %s78 = scalar_select %p75, %s76, %s77
      %p81 = pneg %p75
      %p82 = scmp.eq.s32.totalorder %s13, 1
      %p83 = por %p81, %p82
      %p84 = scmp.ne.s32.totalorder %s76, %s79
      %p85 = scmp.eq.s32.totalorder %s13, 0
      %p86 = por %p84, %p85
      %p87 = scmp.ne.s32.totalorder %s76, %s79
      %p88 = scmp.eq.s32.totalorder %s18, 1
      %p89 = por %p87, %p88
      %p90 = scmp.ne.s32.totalorder %s79, %s80
      %p91 = scmp.eq.s32.totalorder %s18, 0
      %p92 = por %p90, %p91
      %p93 = scmp.ne.s32.totalorder %s79, %s80
      %p94 = scmp.eq.s32.totalorder %s19, 1
      %p95 = por %p93, %p94
      %p97 = scmp.ne.s32.totalorder %s80, %s96
      %p98 = scmp.eq.s32.totalorder %s19, 0
      %p99 = por %p97, %p98
      %p100 = scmp.le.s32.totalorder 1, %s13
      %p101 = scmp.lt.s32.totalorder %s13, 3
      %p102 = pnand %p100, %p101
      %p103 = pneg %p102
      // Predicated region
      $region9: #{tpu_custom_call.1} parent=5 // pred_check
        _
      $region10: #{tpu_custom_call.1} parent=5 // pred_check_branch
        %105 = sbr.rel (%p102) target = $region12
      $region11: #{tpu_custom_call.1} parent=5 // pred_region
        %s106 = ssub.s32 %s13, 1
      $region12: #{tpu_custom_call.1} parent=5 // pred_fallthru
        _
      %p107 = scmp.lt.s32.totalorder %s13, 2
      // Predicated region
      $region13: #{tpu_custom_call.1} parent=5 // pred_check
        %p108 = pneg %p107
      $region14: #{tpu_custom_call.1} parent=5 // pred_check_branch
        %110 = sbr.rel (%p108) target = $region16
      $region15: #{tpu_custom_call.1} parent=5 // pred_region
        // Predicated region
        $region17: #{tpu_custom_call.1} parent=15 // pred_check
          %p111 = pneg %p56
        $region18: #{tpu_custom_call.1} parent=15 // pred_check_branch
          %113 = sbr.rel (%p111) target = $region20
        $region19: #{tpu_custom_call.1} parent=15 // pred_region
          %s114 = sand.u32 %s46, 1
          %s115 = scalar_lea.sflag [#allocation3], %s114
          %s116 = sand.u32 %s46, 1
          %s117 = smul.addr %s116, 8
          %s118 = scalar_lea.vmem [#allocation2], %s117
          %s119 = smul.u32 2, %s22
          %121 = vsyncadd %s115, 0
          %s122 = smul.addr %s21, 2
          %s123 = sadd.s32 %s119, %s122
          %s124 = smul.addr %s20, 4
          %s125 = sadd.s32 %s123, %s124
          %s126 = smul.addr %s125, 2
          %s127 = scalar_lea.hbm %s0, %s126
          %s128 = sshll.u32 %s127, 4
          %s129 = int_to_ptr.hbm [resolvable:$true] %s128
          %s130 = sshll.u32 %s118, 4
          %s131 = int_to_ptr.vmem [resolvable:$true] %s130
          %136 = dma.hbm_to_vmem [thread:$0]  %s129, 128, %s131, %s115, 64, 64, 4
        $region20: #{tpu_custom_call.1} parent=15 // pred_fallthru
          _
      $region16: #{tpu_custom_call.1} parent=5 // pred_fallthru
        _
      %p137 = scmp.le.s32.totalorder 1, %s13
      %p138 = scmp.lt.s32.totalorder %s13, 3
      %p139 = pnand %p137, %p138
      %p140 = pneg %p139
      // Predicated region
      $region21: #{tpu_custom_call.1} parent=5 // pred_check
        _
      $region22: #{tpu_custom_call.1} parent=5 // pred_check_branch
        %142 = sbr.rel (%p139) target = $region24
      $region23: #{tpu_custom_call.1} parent=5 // pred_region
        %s143 = ssub.s32 %s13, 1
        %s144 = sand.u32 %s49, 1
        %s145 = scalar_lea.sflag [#allocation3], %s144
        %s146 = sand.u32 %s49, 1
        %s147 = smul.addr %s146, 8
        %s148 = scalar_lea.vmem [#allocation2], %s147
        // Predicated region
        $region25: #{tpu_custom_call.1} parent=23 // pred_check
          %p149 = pneg %p62
        $region26: #{tpu_custom_call.1} parent=23 // pred_check_branch
          %151 = sbr.rel (%p149) target = $region28
        $region27: #{tpu_custom_call.1} parent=23 // pred_region
          %153 = dma.done %s145, 128
        $region28: #{tpu_custom_call.1} parent=23 // pred_fallthru
          _
        %s154 = sand.u32 %s49, 1
        %s155 = scalar_lea.sflag [#allocation3], %s154
        %s156 = sand.u32 %s49, 1
        %s157 = smul.addr %s156, 8
        %s158 = scalar_lea.vmem [#allocation2], %s157
        %p159 = pneg %p62
        %p160 = pneg %p59
        %p161 = pneg %p92
        %p162 = pneg %p89
        %s163 = sand.u32 %s79, 1
        %s164 = scalar_lea.sflag [#allocation4], %s163
        %s165 = sand.u32 %s79, 1
        %s166 = smul.addr %s165, 8
        %s167 = scalar_lea.vmem [#allocation5], %s166
        %s168 = smul.u32 2, %s25
        %s169 = smul.u32 2, %s25
        %v170 = vld [vmem:[%s148] ss:$2 sm:$0x3]
        %s171 = scalar_lea.vmem %s148, 4 [#allocation2]
        %v172 = vld [vmem:[%s171] ss:$2 sm:$0x3]
        %175 = vst [vmem:[#allocation1] ss:$4 sm:$0xff] %v170
        %s176 = scalar_lea.vmem [#allocation1], 1
        %177 = vst [vmem:[%s176] ss:$4 sm:$0xff] %v172
        %v178 = vld [vmem:[#allocation1] sm:$0xff]
        %180 = vst [vmem:[%s167] sm:$0x33] %v178
        %s181 = scalar_lea.vmem %s148, 1 [#allocation2]
        %v182 = vld [vmem:[%s181] ss:$2 sm:$0x3]
        %s183 = scalar_lea.vmem %s148, 5 [#allocation2]
        %v184 = vld [vmem:[%s183] ss:$2 sm:$0x3]
        %s187 = scalar_lea.vmem [#allocation1], 2
        %188 = vst [vmem:[%s187] ss:$4 sm:$0xff] %v182
        %s189 = scalar_lea.vmem [#allocation1], 3
        %190 = vst [vmem:[%s189] ss:$4 sm:$0xff] %v184
        %v191 = vld [vmem:[#allocation1] sm:$0xff]
        %193 = vst [vmem:[%s167] sm:$0xcc] %v191
        %s194 = sand.u32 %s79, 1
        %s195 = scalar_lea.sflag [#allocation4], %s194
        %s196 = sand.u32 %s79, 1
        %s197 = smul.addr %s196, 8
        %s198 = scalar_lea.vmem [#allocation5], %s197
        // Predicated region
        $region29: #{tpu_custom_call.1} parent=23 // pred_check
          %p199 = pneg %p89
        $region30: #{tpu_custom_call.1} parent=23 // pred_check_branch
          %201 = sbr.rel (%p199) target = $region32
        $region31: #{tpu_custom_call.1} parent=23 // pred_region
          %s202 = smul.u32 2, %s25
          %204 = vsyncadd %s195, 0
          %s205 = smul.addr %s24, 2
          %s206 = sadd.s32 %s202, %s205
          %s207 = smul.addr %s23, 2
          %s208 = sadd.s32 %s206, %s207
          %s209 = smul.addr %s208, 4
          %s210 = scalar_lea.hbm %s1, %s209
          %s212 = sshll.u32 %s198, 4
          %s213 = int_to_ptr.vmem [resolvable:$true] %s212
          %s214 = sshll.u32 %s210, 4
          %s215 = int_to_ptr.hbm [resolvable:$true] %s214
          %217 = dma.vmem_to_hbm [thread:$0]  %s213, 128, %s215, %s195
        $region32: #{tpu_custom_call.1} parent=23 // pred_fallthru
          _
      $region24: #{tpu_custom_call.1} parent=5 // pred_fallthru
        _
      %p218 = scmp.le.s32.totalorder 2, %s13
      // Predicated region
      $region33: #{tpu_custom_call.1} parent=5 // pred_check
        %p219 = pneg %p218
      $region34: #{tpu_custom_call.1} parent=5 // pred_check_branch
        %221 = sbr.rel (%p219) target = $region36
      $region35: #{tpu_custom_call.1} parent=5 // pred_region
        %s222 = ssub.s32 %s13, 2
        // Predicated region
        $region37: #{tpu_custom_call.1} parent=35 // pred_check
          %p223 = pneg %p95
        $region38: #{tpu_custom_call.1} parent=35 // pred_check_branch
          %225 = sbr.rel (%p223) target = $region40
        $region39: #{tpu_custom_call.1} parent=35 // pred_region
          %s226 = sand.u32 %s80, 1
          %s227 = scalar_lea.sflag [#allocation4], %s226
          %s228 = sand.u32 %s80, 1
          %s229 = smul.addr %s228, 8
          %s230 = scalar_lea.vmem [#allocation5], %s229
          %232 = dma.done %s227, 128
        $region40: #{tpu_custom_call.1} parent=35 // pred_fallthru
          _
      $region36: #{tpu_custom_call.1} parent=5 // pred_fallthru
        _
    $region6: #{tpu_custom_call.1} parent=1 // loop_footer
      %s17 = sadd.s32 1, %s13
    $region7: #{tpu_custom_call.1} parent=1 // loop_footer_branch
      %12 = sbr.rel target = $region3
    $region8: #{tpu_custom_call.1} parent=1 // loop_exit
      _
    %233 = vsyncpa [#allocation3], 1
    %s234 = scalar_lea.sflag [#allocation3], 1
    %235 = vsyncpa %s234, 1
    %236 = vsyncpa [#allocation4], 1
    %s237 = scalar_lea.sflag [#allocation4], 1
    %238 = vsyncpa %s237, 1

</llo_original>
